<compile_context>
chip_gen: v6e
topology: v6e:2x2x1
jax: 0.10.0
libtpu: 0.0.40
codegen_flags: <defaults>
</compile_context>

<pallas_src>
import functools

import jax
import jax.numpy as jnp
from jax.experimental import pallas as pl
from jax.experimental.pallas import tpu as pltpu


# ---------------------------------------------------------------------------
# 3x3 "same" conv kernel (+ optional fused ReLU, + optional fused ReLU->pool)
# ---------------------------------------------------------------------------


def _conv3x3_kernel(xt_ref, xc_ref, xb_ref, w_ref, b_ref, *out_refs,
                    TH, W, apply_relu, fuse_pool):
    """One (batch, row-block) tile of a 3x3 / stride-1 / pad-1 convolution.

    xt_ref: (1, 1, W, Cin)   row above the tile (index clamped; zeroed at edge)
    xc_ref: (1, TH, W, Cin)  tile rows
    xb_ref: (1, 1, W, Cin)   row below the tile (index clamped; zeroed at edge)
    w_ref : (9*Cin, Cout)    reshaped HWIO weights (bf16)
    b_ref : (1, Cout)        bias (f32)
    out_refs[0]: (1, TH, W, Cout)        conv output (optionally ReLU'd), bf16
    out_refs[1]: (1, TH//2, W//2, Cout)  fused ReLU + 2x2 maxpool output, bf16
    """
    o_ref = out_refs[0]
    r = pl.program_id(1)
    n_r = pl.num_programs(1)
    Cin = xc_ref.shape[-1]
    Cout = o_ref.shape[-1]

    top = xt_ref[0]                                     # (1, W, Cin)
    bot = xb_ref[0]                                     # (1, W, Cin)
    top = jnp.where(r == 0, jnp.zeros_like(top), top)   # zero pad at image top
    bot = jnp.where(r == n_r - 1, jnp.zeros_like(bot), bot)
    xh = jnp.concatenate([top, xc_ref[0], bot], axis=0)  # (TH+2, W, Cin)

    zcol = jnp.zeros((TH + 2, 1, Cin), xh.dtype)
    xp = jnp.concatenate([zcol, xh, zcol], axis=1)       # (TH+2, W+2, Cin)

    # im2col: one K = 9*Cin MXU contraction instead of nine small dots.
    cols = [xp[kh:kh + TH, kw:kw + W, :].reshape(TH * W, Cin)
            for kh in range(3) for kw in range(3)]
    patch = jnp.concatenate(cols, axis=-1)               # (TH*W, 9*Cin) bf16

    acc = jnp.dot(patch, w_ref[...], preferred_element_type=jnp.float32)
    acc = acc + b_ref[...]                               # (TH*W, Cout) f32
    if apply_relu:
        acc = jnp.maximum(acc, 0.0)
    o_ref[...] = acc.reshape(1, TH, W, Cout).astype(o_ref.dtype)

    if fuse_pool:
        p_ref = out_refs[1]
        y = jnp.maximum(acc, 0.0).reshape(TH, W, Cout)           # ReLU
        m = jnp.max(y.reshape(TH // 2, 2, W, Cout), axis=1)      # pool rows
        p = jnp.max(m.reshape(TH // 2, W // 2, 2, Cout), axis=2)  # pool cols
        p_ref[...] = p.reshape(1, TH // 2, W // 2, Cout).astype(p_ref.dtype)


def conv3x3(x, w, b, *, apply_relu, fuse_pool=False):
    """x: (N, H, W, Cin) bf16; w: (3,3,Cin,Cout) f32; b: (Cout,) f32.

    Returns the bf16 conv output; if fuse_pool=True also returns the fused
    ReLU + MaxPool2d(2,2) output.
    """
    N, H, W, Cin = x.shape
    Cout = w.shape[-1]
    TH = 8 if H % 8 == 0 else H        # row-block height (TH*W rows feed the MXU)
    R = H // TH
    if fuse_pool:
        # TODO(synk): odd spatial sizes (PyTorch floor-pooling) not handled.
        assert TH % 2 == 0 and W % 2 == 0

    w9 = w.reshape(9 * Cin, Cout).astype(jnp.bfloat16)
    b2 = b.reshape(1, Cout).astype(jnp.float32)

    kernel = functools.partial(_conv3x3_kernel, TH=TH, W=W,
                               apply_relu=apply_relu, fuse_pool=fuse_pool)

    out_shape = [jax.ShapeDtypeStruct((N, H, W, Cout), jnp.bfloat16)]
    out_specs = [pl.BlockSpec((1, TH, W, Cout), lambda n, r: (n, r, 0, 0))]
    if fuse_pool:
        out_shape.append(
            jax.ShapeDtypeStruct((N, H // 2, W // 2, Cout), jnp.bfloat16))
        out_specs.append(
            pl.BlockSpec((1, TH // 2, W // 2, Cout), lambda n, r: (n, r, 0, 0)))

    in_specs = [
        # 1-row halo above/below the tile; index clamped at the image edge,
        # the kernel zeroes it there (replaces wrapper-side jnp.pad).
        pl.BlockSpec((1, 1, W, Cin),
                     lambda n, r: (n, jnp.maximum(r * TH - 1, 0), 0, 0)),
        pl.BlockSpec((1, TH, W, Cin), lambda n, r: (n, r, 0, 0)),
        pl.BlockSpec((1, 1, W, Cin),
                     lambda n, r: (n, jnp.minimum(r * TH + TH, H - 1), 0, 0)),
        pl.BlockSpec((9 * Cin, Cout), lambda n, r: (0, 0)),   # resident weights
        pl.BlockSpec((1, Cout), lambda n, r: (0, 0)),         # resident bias
    ]

    return pl.pallas_call(
        kernel,
        out_shape=tuple(out_shape) if fuse_pool else out_shape[0],
        grid_spec=pltpu.PrefetchScalarGridSpec(
            num_scalar_prefetch=0,
            grid=(N, R),
            in_specs=in_specs,
            out_specs=tuple(out_specs) if fuse_pool else out_specs[0],
        ),
        compiler_params=pltpu.CompilerParams(
            dimension_semantics=("parallel", "parallel"),
            vmem_limit_bytes=32 * 1024 * 1024,
        ),
    )(x, x, x, w9, b2)


# ---------------------------------------------------------------------------
# Tiled L1 (mean absolute error) reduction
# ---------------------------------------------------------------------------


def _l1_sum_kernel(a_ref, b_ref, o_ref):
    @pl.when(pl.program_id(0) == 0)
    def _():
        o_ref[...] = jnp.zeros_like(o_ref)
    d = jnp.abs(a_ref[...].astype(jnp.float32) - b_ref[...].astype(jnp.float32))
    o_ref[...] = o_ref[...] + jnp.sum(d, keepdims=True)


def _row_tile(rows):
    for tr in (1024, 512, 256, 128, 64, 32, 16, 8):
        if rows % tr == 0:
            return tr
    return rows


def l1_loss(a, b):
    """Mean absolute error over the full tensors (== torch.nn.L1Loss())."""
    c = a.shape[-1]
    a2 = a.reshape(-1, c)
    b2 = b.reshape(-1, c)
    rows = a2.shape[0]
    tr = _row_tile(rows)
    s = pl.pallas_call(
        _l1_sum_kernel,
        out_shape=jax.ShapeDtypeStruct((1, 1), jnp.float32),
        grid_spec=pltpu.PrefetchScalarGridSpec(
            num_scalar_prefetch=0,
            grid=(rows // tr,),
            in_specs=[pl.BlockSpec((tr, c), lambda i: (i, 0)),
                      pl.BlockSpec((tr, c), lambda i: (i, 0))],
            out_specs=pl.BlockSpec((1, 1), lambda i: (0, 0)),
        ),
        compiler_params=pltpu.CompilerParams(
            dimension_semantics=("arbitrary",)),
    )(a2, b2)
    return s[0, 0] / jnp.float32(a.size)


# ---------------------------------------------------------------------------
# VGGExtractor forward (glue) + perceptual-loss demo
# ---------------------------------------------------------------------------

VGG_MEAN = jnp.array([0.485, 0.456, 0.406], jnp.float32)
VGG_STD = jnp.array([0.229, 0.224, 0.225], jnp.float32)

LAYER_NAME_LIST = ("conv1_2", "conv2_2")   # features requested from the extractor
LAYER_WEIGHTS = {"conv1_2": 0.5, "conv2_2": 1.0}
PERCEPTUAL_WEIGHT = 1.0
STYLE_WEIGHT = 0.0  # -> style loss is None


def init_params(key):
    """Deterministic init of VGG19 conv weights up to conv2_2 (HWIO layout)."""
    keys = jax.random.split(key, 8)

    def conv_init(kw, kb, cin, cout):
        fan_in = 3 * 3 * cin
        w = jax.random.normal(kw, (3, 3, cin, cout), jnp.float32) * (fan_in ** -0.5)
        b = jax.random.normal(kb, (cout,), jnp.float32) * 0.01
        return w, b

    return {
        "conv1_1": conv_init(keys[0], keys[1], 3, 64),
        "conv1_2": conv_init(keys[2], keys[3], 64, 64),
        "conv2_1": conv_init(keys[4], keys[5], 64, 128),
        "conv2_2": conv_init(keys[6], keys[7], 128, 128),
    }


def vgg_extract(x_nchw, params, use_input_norm=True, range_norm=False):
    """VGGExtractor.forward for layer_name_list = ('conv1_2', 'conv2_2').

    Runs the VGG19 prefix through conv2_2 (the deepest requested layer) and
    returns {name: feature}.  Features are captured right after the conv
    (pre-ReLU), exactly like the PyTorch module; they are kept in bf16 (NHWC).
    """
    x = jnp.transpose(x_nchw, (0, 2, 3, 1)).astype(jnp.float32)  # NCHW -> NHWC
    if range_norm:
        x = (x + 1.0) / 2.0
    if use_input_norm:
        x = (x - VGG_MEAN) / VGG_STD
    x = x.astype(jnp.bfloat16)

    feats = {}
    w, b = params["conv1_1"]
    x = conv3x3(x, w, b, apply_relu=True)                  # conv1_1 + relu1_1
    w, b = params["conv1_2"]
    f12, x = conv3x3(x, w, b, apply_relu=False, fuse_pool=True)
    feats["conv1_2"] = f12                                 # pre-ReLU feature
    # x is relu1_2 + pool1, fused into the conv1_2 kernel epilogue.
    w, b = params["conv2_1"]
    x = conv3x3(x, w, b, apply_relu=True)                  # conv2_1 + relu2_1
    w, b = params["conv2_2"]
    feats["conv2_2"] = conv3x3(x, w, b, apply_relu=False)  # conv2_2 (pre-ReLU)
    return feats


def perceptual_loss(x, gt, params):
    """L1 perceptual loss over the extracted features (demo usage)."""
    n = x.shape[0]
    # Single batched feature pass over [x; gt]: half the pallas_call launches,
    # weights stay resident across the doubled batch.
    both = jnp.concatenate([x, jax.lax.stop_gradient(gt)], axis=0)
    feats = vgg_extract(both, params)

    percep = jnp.float32(0.0)
    if PERCEPTUAL_WEIGHT > 0:
        for k, lw in LAYER_WEIGHTS.items():
            f = feats[k]
            percep = percep + l1_loss(f[:n], f[n:]) * lw
        percep = percep * PERCEPTUAL_WEIGHT

    style = None  # style_weight == 0.0 in this configuration
    return percep, style


# ---------------------------------------------------------------------------
# Main
# ---------------------------------------------------------------------------

if __name__ == "__main__":
    key = jax.random.PRNGKey(0)
    kp, kx, kg = jax.random.split(key, 3)
    params = init_params(kp)

    # Inputs follow the PyTorch NCHW convention: (N, 3, H, W).
    x = jax.random.uniform(kx, (2, 3, 16, 16), jnp.float32)
    gt = jax.random.uniform(kg, (2, 3, 16, 16), jnp.float32)

    feats = vgg_extract(x, params)          # VGGExtractor.forward
    percep, style = perceptual_loss(x, gt, params)
    jax.block_until_ready((feats, percep))
    assert set(feats) == set(LAYER_NAME_LIST)
    assert style is None
    print("KERNEL_OK")
</pallas_src>

<mosaic_0001>
module attributes {stable_mosaic.version = 11 : i64} {
  func.func @_conv3x3_kernel(%arg0: i32, %arg1: i32, %arg2: memref<1x1x16x3xbf16, #tpu.memory_space<vmem>>, %arg3: memref<1x8x16x3xbf16, #tpu.memory_space<vmem>>, %arg4: memref<1x1x16x3xbf16, #tpu.memory_space<vmem>>, %arg5: memref<27x64xbf16, #tpu.memory_space<vmem>>, %arg6: memref<1x64xf32, #tpu.memory_space<vmem>>, %arg7: memref<1x8x16x64xbf16, #tpu.memory_space<vmem>>) attributes {dimension_semantics = [#tpu.dimension_semantics<parallel>, #tpu.dimension_semantics<parallel>], iteration_bounds = array<i64: 2, 2>, scalar_prefetch = 0 : i64, scratch_operands = 0 : i64, tpu.core_type = #tpu.core_type<tc>, window_params = [{transform_indices = @transform_0, window_bounds = array<i64: 1, 1, 16, 3>}, {transform_indices = @transform_1, window_bounds = array<i64: 1, 8, 16, 3>}, {transform_indices = @transform_2, window_bounds = array<i64: 1, 1, 16, 3>}, {pipeline_mode = #tpu.pipeline_mode<synchronous>, transform_indices = @transform_3, window_bounds = array<i64: 27, 64>}, {pipeline_mode = #tpu.pipeline_mode<synchronous>, transform_indices = @transform_4, window_bounds = array<i64: 1, 64>}, {transform_indices = @transform_5, window_bounds = array<i64: 1, 8, 16, 64>}]} {
    %c0 = arith.constant 0 : index
    %c0_0 = arith.constant 0 : index
    %c0_1 = arith.constant 0 : index
    %c0_2 = arith.constant 0 : index
    %0 = vector.load %arg2[%c0, %c0_0, %c0_1, %c0_2] : memref<1x1x16x3xbf16, #tpu.memory_space<vmem>>, vector<1x1x16x3xbf16>
    %1 = vector.shape_cast %0 : vector<1x1x16x3xbf16> to vector<1x16x3xbf16>
    %c0_3 = arith.constant 0 : index
    %c0_4 = arith.constant 0 : index
    %c0_5 = arith.constant 0 : index
    %c0_6 = arith.constant 0 : index
    %2 = vector.load %arg4[%c0_3, %c0_4, %c0_5, %c0_6] : memref<1x1x16x3xbf16, #tpu.memory_space<vmem>>, vector<1x1x16x3xbf16>
    %3 = vector.shape_cast %2 : vector<1x1x16x3xbf16> to vector<1x16x3xbf16>
    %c0_i32 = arith.constant 0 : i32
    %4 = arith.cmpi eq, %arg1, %c0_i32 : i32
    %cst = arith.constant 0.000000e+00 : bf16
    %5 = vector.broadcast %cst : bf16 to vector<1x16x3xbf16>
    %6 = arith.select %4, %5, %1 : vector<1x16x3xbf16>
    %c1_i32 = arith.constant 1 : i32
    %7 = arith.cmpi eq, %arg1, %c1_i32 : i32
    %cst_7 = arith.constant 0.000000e+00 : bf16
    %8 = vector.broadcast %cst_7 : bf16 to vector<1x16x3xbf16>
    %9 = arith.select %7, %8, %3 : vector<1x16x3xbf16>
    %c0_8 = arith.constant 0 : index
    %c0_9 = arith.constant 0 : index
    %c0_10 = arith.constant 0 : index
    %c0_11 = arith.constant 0 : index
    %10 = vector.load %arg3[%c0_8, %c0_9, %c0_10, %c0_11] : memref<1x8x16x3xbf16, #tpu.memory_space<vmem>>, vector<1x8x16x3xbf16>
    %11 = vector.shape_cast %10 : vector<1x8x16x3xbf16> to vector<8x16x3xbf16>
    %12 = tpu.concatenate %6, %11, %9 in 0 : vector<1x16x3xbf16>, vector<8x16x3xbf16>, vector<1x16x3xbf16> -> vector<10x16x3xbf16>
    %cst_12 = arith.constant 0.000000e+00 : bf16
    %13 = vector.broadcast %cst_12 : bf16 to vector<10x1x3xbf16>
    %14 = tpu.concatenate %13, %12, %13 in 1 : vector<10x1x3xbf16>, vector<10x16x3xbf16>, vector<10x1x3xbf16> -> vector<10x18x3xbf16>
    %15 = vector.extract_strided_slice %14 {offsets = [0, 0, 0], sizes = [8, 16, 3], strides = [1, 1, 1]} : vector<10x18x3xbf16> to vector<8x16x3xbf16>
    %16 = vector.shape_cast %15 : vector<8x16x3xbf16> to vector<128x3xbf16>
    %17 = vector.extract_strided_slice %14 {offsets = [0, 1, 0], sizes = [8, 16, 3], strides = [1, 1, 1]} : vector<10x18x3xbf16> to vector<8x16x3xbf16>
    %18 = vector.shape_cast %17 : vector<8x16x3xbf16> to vector<128x3xbf16>
    %19 = vector.extract_strided_slice %14 {offsets = [0, 2, 0], sizes = [8, 16, 3], strides = [1, 1, 1]} : vector<10x18x3xbf16> to vector<8x16x3xbf16>
    %20 = vector.shape_cast %19 : vector<8x16x3xbf16> to vector<128x3xbf16>
    %21 = vector.extract_strided_slice %14 {offsets = [1, 0, 0], sizes = [8, 16, 3], strides = [1, 1, 1]} : vector<10x18x3xbf16> to vector<8x16x3xbf16>
    %22 = vector.shape_cast %21 : vector<8x16x3xbf16> to vector<128x3xbf16>
    %23 = vector.extract_strided_slice %14 {offsets = [1, 1, 0], sizes = [8, 16, 3], strides = [1, 1, 1]} : vector<10x18x3xbf16> to vector<8x16x3xbf16>
    %24 = vector.shape_cast %23 : vector<8x16x3xbf16> to vector<128x3xbf16>
    %25 = vector.extract_strided_slice %14 {offsets = [1, 2, 0], sizes = [8, 16, 3], strides = [1, 1, 1]} : vector<10x18x3xbf16> to vector<8x16x3xbf16>
    %26 = vector.shape_cast %25 : vector<8x16x3xbf16> to vector<128x3xbf16>
    %27 = vector.extract_strided_slice %14 {offsets = [2, 0, 0], sizes = [8, 16, 3], strides = [1, 1, 1]} : vector<10x18x3xbf16> to vector<8x16x3xbf16>
    %28 = vector.shape_cast %27 : vector<8x16x3xbf16> to vector<128x3xbf16>
    %29 = vector.extract_strided_slice %14 {offsets = [2, 1, 0], sizes = [8, 16, 3], strides = [1, 1, 1]} : vector<10x18x3xbf16> to vector<8x16x3xbf16>
    %30 = vector.shape_cast %29 : vector<8x16x3xbf16> to vector<128x3xbf16>
    %31 = vector.extract_strided_slice %14 {offsets = [2, 2, 0], sizes = [8, 16, 3], strides = [1, 1, 1]} : vector<10x18x3xbf16> to vector<8x16x3xbf16>
    %32 = vector.shape_cast %31 : vector<8x16x3xbf16> to vector<128x3xbf16>
    %33 = tpu.concatenate %16, %18, %20, %22, %24, %26, %28, %30, %32 in 1 : vector<128x3xbf16>, vector<128x3xbf16>, vector<128x3xbf16>, vector<128x3xbf16>, vector<128x3xbf16>, vector<128x3xbf16>, vector<128x3xbf16>, vector<128x3xbf16>, vector<128x3xbf16> -> vector<128x27xbf16>
    %c0_13 = arith.constant 0 : index
    %c0_14 = arith.constant 0 : index
    %34 = vector.load %arg5[%c0_13, %c0_14] : memref<27x64xbf16, #tpu.memory_space<vmem>>, vector<27x64xbf16>
    %cst_15 = arith.constant dense<0.000000e+00> : vector<128x64xf32>
    %35 = tpu.matmul %33, %34, %cst_15 {dimension_numbers = #tpu.dot_dimension_numbers<[1], [0], [0], [1], [0, 0, 1, 1], [], []>} : vector<128x27xbf16>, vector<27x64xbf16>, vector<128x64xf32> -> vector<128x64xf32>
    %c0_16 = arith.constant 0 : index
    %c0_17 = arith.constant 0 : index
    %36 = vector.load %arg6[%c0_16, %c0_17] : memref<1x64xf32, #tpu.memory_space<vmem>>, vector<1x64xf32>
    %37 = vector.broadcast %36 : vector<1x64xf32> to vector<128x64xf32>
    %38 = arith.addf %35, %37 : vector<128x64xf32>
    %cst_18 = arith.constant 0.000000e+00 : f32
    %39 = vector.broadcast %cst_18 : f32 to vector<128x64xf32>
    %40 = arith.maximumf %38, %39 : vector<128x64xf32>
    %41 = vector.shape_cast %40 : vector<128x64xf32> to vector<1x8x16x64xf32>
    %42 = arith.truncf %41 : vector<1x8x16x64xf32> to vector<1x8x16x64xbf16>
    %c0_19 = arith.constant 0 : index
    %c0_20 = arith.constant 0 : index
    %c0_21 = arith.constant 0 : index
    %c0_22 = arith.constant 0 : index
    %43 = vector.load %arg7[%c0_19, %c0_20, %c0_21, %c0_22] : memref<1x8x16x64xbf16, #tpu.memory_space<vmem>>, vector<1x8x16x64xbf16>
    tpu.vector_store %arg7[%c0_19, %c0_20, %c0_21, %c0_22], %42 {strides = array<i32>} : memref<1x8x16x64xbf16, #tpu.memory_space<vmem>>, vector<1x8x16x64xbf16>,
    return
  }
  func.func @transform_0(%arg0: i32, %arg1: i32) -> (i32, i32, i32, i32) {
    %c8_i32 = arith.constant 8 : i32
    %0 = arith.muli %arg1, %c8_i32 : i32
    %c1_i32 = arith.constant 1 : i32
    %1 = arith.subi %0, %c1_i32 : i32
    %c0_i32 = arith.constant 0 : i32
    %2 = arith.maxsi %1, %c0_i32 : i32
    %c0_i32_0 = arith.constant 0 : i32
    %c0_i32_1 = arith.constant 0 : i32
    %c0_i32_2 = arith.constant 0 : i32
    return %arg0, %2, %c0_i32_0, %c0_i32_1 : i32, i32, i32, i32
  }
  func.func @transform_1(%arg0: i32, %arg1: i32) -> (i32, i32, i32, i32) {
    %c0_i32 = arith.constant 0 : i32
    %c0_i32_0 = arith.constant 0 : i32
    %c0_i32_1 = arith.constant 0 : i32
    return %arg0, %arg1, %c0_i32, %c0_i32_0 : i32, i32, i32, i32
  }
  func.func @transform_2(%arg0: i32, %arg1: i32) -> (i32, i32, i32, i32) {
    %c8_i32 = arith.constant 8 : i32
    %0 = arith.muli %arg1, %c8_i32 : i32
    %c8_i32_0 = arith.constant 8 : i32
    %1 = arith.addi %0, %c8_i32_0 : i32
    %c15_i32 = arith.constant 15 : i32
    %2 = arith.minsi %1, %c15_i32 : i32
    %c0_i32 = arith.constant 0 : i32
    %c0_i32_1 = arith.constant 0 : i32
    %c0_i32_2 = arith.constant 0 : i32
    return %arg0, %2, %c0_i32, %c0_i32_1 : i32, i32, i32, i32
  }
  func.func @transform_3(%arg0: i32, %arg1: i32) -> (i32, i32) {
    %c0_i32 = arith.constant 0 : i32
    %c0_i32_0 = arith.constant 0 : i32
    %c0_i32_1 = arith.constant 0 : i32
    return %c0_i32, %c0_i32_0 : i32, i32
  }
  func.func @transform_4(%arg0: i32, %arg1: i32) -> (i32, i32) {
    %c0_i32 = arith.constant 0 : i32
    %c0_i32_0 = arith.constant 0 : i32
    %c0_i32_1 = arith.constant 0 : i32
    return %c0_i32, %c0_i32_0 : i32, i32
  }
  func.func @transform_5(%arg0: i32, %arg1: i32) -> (i32, i32, i32, i32) {
    %c0_i32 = arith.constant 0 : i32
    %c0_i32_0 = arith.constant 0 : i32
    %c0_i32_1 = arith.constant 0 : i32
    return %arg0, %arg1, %c0_i32, %c0_i32_0 : i32, i32, i32, i32
  }
}

</mosaic_0001>

<llo_original>
// kernel: tpu_custom_call.1
$region0: #{tpu_custom_call.1}
  #allocation0 [shape = 'u32[]', space=smem, size = 0x4, offset = 0x4, fixed_abs, tag = 'smem constant byte address 0x4 - core index']
  #allocation1 [shape = 'u32[144,128]{1,0:T(1,128)}', space=vmem, size = 0x12000, scoped, tag = 'internal scratch']
  %s0 = inlined_call_operand.vmem [shape: bf16[2,16,16,3], index: 0, kind: input, shape index: {}]
  %s1 = inlined_call_operand.vmem [shape: bf16[2,16,16,3], index: 1, kind: input, shape index: {}]
  %s2 = inlined_call_operand.vmem [shape: bf16[2,16,16,3], index: 2, kind: input, shape index: {}]
  %s3 = inlined_call_operand.vmem [shape: bf16[27,64], index: 3, kind: input, shape index: {}]
  %s4 = inlined_call_operand.vmem [shape: f32[1,64], index: 4, kind: input, shape index: {}]
  %s5 = inlined_call_operand.hbm [shape: bf16[2,16,16,64], index: 5, kind: output, shape index: {}]
  %s6 = sld [smem:[#allocation0]]
  $region53: #{tpu_custom_call.1} parent=0
    _
  %s8 = ssub.s32 1, %s6
  %s9 = scalar_select 0, %s8, %s6
  $region1: #{tpu_custom_call.1} parent=0
    #allocation2 [shape = 'u8[65536]{0}', space=vmem, size = 0x10000, scoped, tag = 'output window, operand 0']
    #allocation3 [shape = 's32[2]{0}', space=sflag, size = 0x8, scoped, tag = 'scoped memory for tpu_custom_call.1']
    %10 = vsyncpa [#allocation3], 0
    %s11 = scalar_lea.sflag [#allocation3], 1
    %12 = vsyncpa %s11, 0
    loop: start=0, step=1, limit=6
    $region2: #{tpu_custom_call.1} parent=1 // loop_pre_header
      _
    $region3: #{tpu_custom_call.1} parent=1 // loop_header
      %s14 = sphi 0, %s18
      %p15 = scmp.ge.s32.totalorder %s14, 6
      %s21 = sphi 0, %s33
      %s22 = sphi 0, %s29
      %s23 = sphi 0, %s21
      %s24 = sphi 0, %s22
      %s25 = sphi 0, %s23
      %s26 = sphi 0, %s24
      %s46 = sphi 0, %s48
      %s49 = sphi 0, %s46
      %s50 = sphi 0, %s49
      %s66 = sphi 0, %s50
      %s74 = sphi 0, %s76
      %s77 = sphi 0, %s74
      %s78 = sphi 0, %s77
      %s94 = sphi 0, %s78
      %s110 = sphi 0, %s112
      %s113 = sphi 0, %s110
      %s114 = sphi 0, %s113
      %s130 = sphi 0, %s114
      %s134 = sphi 0, %s134
      %s136 = sphi 0, %s134
      %s137 = sphi 0, %s136
      %s151 = sphi 0, %s137
      %s155 = sphi 0, %s155
      %s157 = sphi 0, %s155
      %s158 = sphi 0, %s157
      %s172 = sphi 0, %s158
      %s180 = sphi 0, %s182
      %s183 = sphi 0, %s180
      %s184 = sphi 0, %s183
      %s200 = sphi 0, %s184
    $region4: #{tpu_custom_call.1} parent=1 // loop_header_branch
      %17 = sbr.rel (%p15) target = $region8
    $region5: #{tpu_custom_call.1} parent=1 // loop_body
      %s19 = ssub.s32 %s14, 1
      %s20 = ssub.s32 %s14, 2
      %s27 = sadd.s32 1, %s22
      %p28 = scmp.ge.s32.totalorder %s27, 2
      %s29 = scalar_select %p28, 0, %s27
      %s30 = sadd.s32 1, %s21
      %s31 = scalar_select %p28, %s30, %s21
      %p32 = scmp.ge.s32.totalorder %s31, 2
      %s33 = scalar_select %p32, 0, %s31
      %s34 = smul.u32 %s22, 8
      %s35 = ssub.s32 %s34, 1
      %p36 = scmp.gt.s32.totalorder %s35, 0
      %s37 = scalar_select %p36, %s35, 0
      %s38 = smul.u32 %s29, 8
      %s39 = ssub.s32 %s38, 1
      %p40 = scmp.gt.s32.totalorder %s39, 0
      %s41 = scalar_select %p40, %s39, 0
      %s42 = ssub.s32 %s21, %s33
      %s43 = ssub.s32 %s37, %s41
      %s44 = sor.u32 %s42, %s43
      %p45 = scmp.eq.s32.totalorder %s44, 0
      %s47 = sadd.s32 %s46, 1
      %s48 = scalar_select %p45, %s46, %s47
      %p51 = pneg %p45
      %p52 = scmp.eq.s32.totalorder %s14, 3
      %p53 = por %p51, %p52
      %p54 = scmp.ne.s32.totalorder %s46, %s49
      %p55 = scmp.eq.s32.totalorder %s14, 0
      %p56 = por %p54, %p55
      %p57 = scmp.ne.s32.totalorder %s46, %s49
      %p58 = scmp.eq.s32.totalorder %s19, 3
      %p59 = por %p57, %p58
      %p60 = scmp.ne.s32.totalorder %s49, %s50
      %p61 = scmp.eq.s32.totalorder %s19, 0
      %p62 = por %p60, %p61
      %p63 = scmp.ne.s32.totalorder %s49, %s50
      %p64 = scmp.eq.s32.totalorder %s20, 3
      %p65 = por %p63, %p64
      %p67 = scmp.ne.s32.totalorder %s50, %s66
      %p68 = scmp.eq.s32.totalorder %s20, 0
      %p69 = por %p67, %p68
      %s70 = ssub.s32 %s21, %s33
      %s71 = ssub.s32 %s22, %s29
      %s72 = sor.u32 %s70, %s71
      %p73 = scmp.eq.s32.totalorder %s72, 0
      %s75 = sadd.s32 %s74, 1
      %s76 = scalar_select %p73, %s74, %s75
      %p79 = pneg %p73
      %p80 = scmp.eq.s32.totalorder %s14, 3
      %p81 = por %p79, %p80
      %p82 = scmp.ne.s32.totalorder %s74, %s77
      %p83 = scmp.eq.s32.totalorder %s14, 0
      %p84 = por %p82, %p83
      %p85 = scmp.ne.s32.totalorder %s74, %s77
      %p86 = scmp.eq.s32.totalorder %s19, 3
      %p87 = por %p85, %p86
      %p88 = scmp.ne.s32.totalorder %s77, %s78
      %p89 = scmp.eq.s32.totalorder %s19, 0
      %p90 = por %p88, %p89
      %p91 = scmp.ne.s32.totalorder %s77, %s78
      %p92 = scmp.eq.s32.totalorder %s20, 3
      %p93 = por %p91, %p92
      %p95 = scmp.ne.s32.totalorder %s78, %s94
      %p96 = scmp.eq.s32.totalorder %s20, 0
      %p97 = por %p95, %p96
      %s98 = smul.u32 %s22, 8
      %s99 = sadd.s32 %s98, 8
      %p100 = scmp.lt.s32.totalorder %s99, 15
      %s101 = scalar_select %p100, %s99, 15
      %s102 = smul.u32 %s29, 8
      %s103 = sadd.s32 %s102, 8
      %p104 = scmp.lt.s32.totalorder %s103, 15
      %s105 = scalar_select %p104, %s103, 15
      %s106 = ssub.s32 %s21, %s33
      %s107 = ssub.s32 %s101, %s105
      %s108 = sor.u32 %s106, %s107
      %p109 = scmp.eq.s32.totalorder %s108, 0
      %s111 = sadd.s32 %s110, 1
      %s112 = scalar_select %p109, %s110, %s111
      %p115 = pneg %p109
      %p116 = scmp.eq.s32.totalorder %s14, 3
      %p117 = por %p115, %p116
      %p118 = scmp.ne.s32.totalorder %s110, %s113
      %p119 = scmp.eq.s32.totalorder %s14, 0
      %p120 = por %p118, %p119
      %p121 = scmp.ne.s32.totalorder %s110, %s113
      %p122 = scmp.eq.s32.totalorder %s19, 3
      %p123 = por %p121, %p122
      %p124 = scmp.ne.s32.totalorder %s113, %s114
      %p125 = scmp.eq.s32.totalorder %s19, 0
      %p126 = por %p124, %p125
      %p127 = scmp.ne.s32.totalorder %s113, %s114
      %p128 = scmp.eq.s32.totalorder %s20, 3
      %p129 = por %p127, %p128
      %p131 = scmp.ne.s32.totalorder %s114, %s130
      %p132 = scmp.eq.s32.totalorder %s20, 0
      %p133 = por %p131, %p132
      %s135 = sadd.s32 %s134, 1
      %p138 = scmp.eq.s32.totalorder %s14, 3
      %p139 = scmp.ne.s32.totalorder %s134, %s136
      %p140 = scmp.eq.s32.totalorder %s14, 0
      %p141 = por %p139, %p140
      %p142 = scmp.ne.s32.totalorder %s134, %s136
      %p143 = scmp.eq.s32.totalorder %s19, 3
      %p144 = por %p142, %p143
      %p145 = scmp.ne.s32.totalorder %s136, %s137
      %p146 = scmp.eq.s32.totalorder %s19, 0
      %p147 = por %p145, %p146
      %p148 = scmp.ne.s32.totalorder %s136, %s137
      %p149 = scmp.eq.s32.totalorder %s20, 3
      %p150 = por %p148, %p149
      %p152 = scmp.ne.s32.totalorder %s137, %s151
      %p153 = scmp.eq.s32.totalorder %s20, 0
      %p154 = por %p152, %p153
      %s156 = sadd.s32 %s155, 1
      %p159 = scmp.eq.s32.totalorder %s14, 3
      %p160 = scmp.ne.s32.totalorder %s155, %s157
      %p161 = scmp.eq.s32.totalorder %s14, 0
      %p162 = por %p160, %p161
      %p163 = scmp.ne.s32.totalorder %s155, %s157
      %p164 = scmp.eq.s32.totalorder %s19, 3
      %p165 = por %p163, %p164
      %p166 = scmp.ne.s32.totalorder %s157, %s158
      %p167 = scmp.eq.s32.totalorder %s19, 0
      %p168 = por %p166, %p167
      %p169 = scmp.ne.s32.totalorder %s157, %s158
      %p170 = scmp.eq.s32.totalorder %s20, 3
      %p171 = por %p169, %p170
      %p173 = scmp.ne.s32.totalorder %s158, %s172
      %p174 = scmp.eq.s32.totalorder %s20, 0
      %p175 = por %p173, %p174
      %s176 = ssub.s32 %s21, %s33
      %s177 = ssub.s32 %s22, %s29
      %s178 = sor.u32 %s176, %s177
      %p179 = scmp.eq.s32.totalorder %s178, 0
      %s181 = sadd.s32 %s180, 1
      %s182 = scalar_select %p179, %s180, %s181
      %p185 = pneg %p179
      %p186 = scmp.eq.s32.totalorder %s14, 3
      %p187 = por %p185, %p186
      %p188 = scmp.ne.s32.totalorder %s180, %s183
      %p189 = scmp.eq.s32.totalorder %s14, 0
      %p190 = por %p188, %p189
      %p191 = scmp.ne.s32.totalorder %s180, %s183
      %p192 = scmp.eq.s32.totalorder %s19, 3
      %p193 = por %p191, %p192
      %p194 = scmp.ne.s32.totalorder %s183, %s184
      %p195 = scmp.eq.s32.totalorder %s19, 0
      %p196 = por %p194, %p195
      %p197 = scmp.ne.s32.totalorder %s183, %s184
      %p198 = scmp.eq.s32.totalorder %s20, 3
      %p199 = por %p197, %p198
      %p201 = scmp.ne.s32.totalorder %s184, %s200
      %p202 = scmp.eq.s32.totalorder %s20, 0
      %p203 = por %p201, %p202
      %p204 = scmp.le.s32.totalorder 1, %s14
      %p205 = scmp.lt.s32.totalorder %s14, 5
      %p206 = pnand %p204, %p205
      %p207 = pneg %p206
      // Predicated region
      $region9: #{tpu_custom_call.1} parent=5 // pred_check
        _
      $region10: #{tpu_custom_call.1} parent=5 // pred_check_branch
        %209 = sbr.rel (%p206) target = $region12
      $region11: #{tpu_custom_call.1} parent=5 // pred_region
        %s210 = ssub.s32 %s14, 1
        // Predicated region
        $region13: #{tpu_custom_call.1} parent=11 // pred_check
          %p211 = pneg %p147
        $region14: #{tpu_custom_call.1} parent=11 // pred_check_branch
          %213 = sbr.rel (%p211) target = $region16
        $region15: #{tpu_custom_call.1} parent=11 // pred_region
          _
        $region16: #{tpu_custom_call.1} parent=11 // pred_fallthru
          _
        // Predicated region
        $region17: #{tpu_custom_call.1} parent=11 // pred_check
          %p214 = pneg %p168
        $region18: #{tpu_custom_call.1} parent=11 // pred_check_branch
          %216 = sbr.rel (%p214) target = $region20
        $region19: #{tpu_custom_call.1} parent=11 // pred_region
          _
        $region20: #{tpu_custom_call.1} parent=11 // pred_fallthru
          _
      $region12: #{tpu_custom_call.1} parent=5 // pred_fallthru
        _
      %p217 = scmp.lt.s32.totalorder %s14, 4
      // Predicated region
      $region21: #{tpu_custom_call.1} parent=5 // pred_check
        %p218 = pneg %p217
      $region22: #{tpu_custom_call.1} parent=5 // pred_check_branch
        %220 = sbr.rel (%p218) target = $region24
      $region23: #{tpu_custom_call.1} parent=5 // pred_region
        // Predicated region
        $region25: #{tpu_custom_call.1} parent=23 // pred_check
          %p221 = pneg %p56
        $region26: #{tpu_custom_call.1} parent=23 // pred_check_branch
          %223 = sbr.rel (%p221) target = $region28
        $region27: #{tpu_custom_call.1} parent=23 // pred_region
          %s224 = smul.u32 %s22, 8
          %s225 = ssub.s32 %s224, 1
          %p226 = scmp.gt.s32.totalorder %s225, 0
          %s227 = scalar_select %p226, %s225, 0
          %p228 = scmp.lt.s32.totalorder %s21, 1
          %s229 = scalar_select %p228, %s21, 1
          %p230 = scmp.lt.s32.totalorder %s227, 15
          %s231 = scalar_select %p230, %s227, 15
          %s232 = smul.addr %s231, 2
          %s233 = smul.addr %s229, 32
          %s234 = sadd.s32 %s232, %s233
          %s235 = smul.addr %s234, 4
          %s236 = scalar_lea.vmem %s0, %s235
          %s237 = smul.u32 %s22, 8
          %s238 = ssub.s32 %s237, 1
          %p239 = scmp.gt.s32.totalorder %s238, 0
          %s240 = scalar_select %p239, %s238, 0
        $region28: #{tpu_custom_call.1} parent=23 // pred_fallthru
          _
        // Predicated region
        $region29: #{tpu_custom_call.1} parent=23 // pred_check
          %p241 = pneg %p84
        $region30: #{tpu_custom_call.1} parent=23 // pred_check_branch
          %243 = sbr.rel (%p241) target = $region32
        $region31: #{tpu_custom_call.1} parent=23 // pred_region
          %s244 = smul.u32 8, %s22
          %p245 = scmp.lt.s32.totalorder %s21, 1
          %s246 = scalar_select %p245, %s21, 1
          %p247 = scmp.lt.s32.totalorder %s244, 15
          %s248 = scalar_select %p247, %s244, 15
          %s249 = smul.addr %s248, 2
          %s250 = smul.addr %s246, 32
          %s251 = sadd.s32 %s249, %s250
          %s252 = smul.addr %s251, 4
          %s253 = scalar_lea.vmem %s1, %s252
          %s254 = smul.u32 8, %s22
        $region32: #{tpu_custom_call.1} parent=23 // pred_fallthru
          _
        // Predicated region
        $region33: #{tpu_custom_call.1} parent=23 // pred_check
          %p255 = pneg %p120
        $region34: #{tpu_custom_call.1} parent=23 // pred_check_branch
          %257 = sbr.rel (%p255) target = $region36
        $region35: #{tpu_custom_call.1} parent=23 // pred_region
          %s258 = smul.u32 %s22, 8
          %s259 = sadd.s32 %s258, 8
          %p260 = scmp.lt.s32.totalorder %s259, 15
          %s261 = scalar_select %p260, %s259, 15
          %p262 = scmp.lt.s32.totalorder %s21, 1
          %s263 = scalar_select %p262, %s21, 1
          %p264 = scmp.lt.s32.totalorder %s261, 15
          %s265 = scalar_select %p264, %s261, 15
          %s266 = smul.addr %s265, 2
          %s267 = smul.addr %s263, 32
          %s268 = sadd.s32 %s266, %s267
          %s269 = smul.addr %s268, 4
          %s270 = scalar_lea.vmem %s2, %s269
          %s271 = smul.u32 %s22, 8
          %s272 = sadd.s32 %s271, 8
          %p273 = scmp.lt.s32.totalorder %s272, 15
          %s274 = scalar_select %p273, %s272, 15
        $region36: #{tpu_custom_call.1} parent=23 // pred_fallthru
          _
      $region24: #{tpu_custom_call.1} parent=5 // pred_fallthru
        _
      %p275 = scmp.le.s32.totalorder 1, %s14
      %p276 = scmp.lt.s32.totalorder %s14, 5
      %p277 = pnand %p275, %p276
      %p278 = pneg %p277
      // Predicated region
      $region37: #{tpu_custom_call.1} parent=5 // pred_check
        _
      $region38: #{tpu_custom_call.1} parent=5 // pred_check_branch
        %280 = sbr.rel (%p277) target = $region40
      $region39: #{tpu_custom_call.1} parent=5 // pred_region
        %s281 = ssub.s32 %s14, 1
        %s282 = smul.u32 %s24, 8
        %s283 = ssub.s32 %s282, 1
        %p284 = scmp.gt.s32.totalorder %s283, 0
        %s285 = scalar_select %p284, %s283, 0
        %p286 = scmp.lt.s32.totalorder %s23, 1
        %s287 = scalar_select %p286, %s23, 1
        %p288 = scmp.lt.s32.totalorder %s285, 15
        %s289 = scalar_select %p288, %s285, 15
        %s290 = smul.addr %s289, 2
        %s291 = smul.addr %s287, 32
        %s292 = sadd.s32 %s290, %s291
        %s293 = smul.addr %s292, 4
        %s294 = scalar_lea.vmem %s0, %s293
        %p295 = pneg %p62
        %p296 = pneg %p59
        %s297 = smul.u32 8, %s24
        %p298 = scmp.lt.s32.totalorder %s23, 1
        %s299 = scalar_select %p298, %s23, 1
        %p300 = scmp.lt.s32.totalorder %s297, 15
        %s301 = scalar_select %p300, %s297, 15
        %s302 = smul.addr %s301, 2
        %s303 = smul.addr %s299, 32
        %s304 = sadd.s32 %s302, %s303
        %s305 = smul.addr %s304, 4
        %s306 = scalar_lea.vmem %s1, %s305
        %p307 = pneg %p90
        %p308 = pneg %p87
        %s309 = smul.u32 %s24, 8
        %s310 = sadd.s32 %s309, 8
        %p311 = scmp.lt.s32.totalorder %s310, 15
        %s312 = scalar_select %p311, %s310, 15
        %p313 = scmp.lt.s32.totalorder %s23, 1
        %s314 = scalar_select %p313, %s23, 1
        %p315 = scmp.lt.s32.totalorder %s312, 15
        %s316 = scalar_select %p315, %s312, 15
        %s317 = smul.addr %s316, 2
        %s318 = smul.addr %s314, 32
        %s319 = sadd.s32 %s317, %s318
        %s320 = smul.addr %s319, 4
        %s321 = scalar_lea.vmem %s2, %s320
        %p322 = pneg %p126
        %p323 = pneg %p123
        %p324 = pneg %p147
        %p325 = pneg %p144
        %p326 = pneg %p168
        %p327 = pneg %p165
        %p328 = pneg %p196
        %p329 = pneg %p193
        %s330 = sand.u32 %s183, 1
        %s331 = scalar_lea.sflag [#allocation3], %s330
        %s332 = sand.u32 %s183, 1
        %s333 = smul.addr %s332, 64
        %s334 = scalar_lea.vmem [#allocation2], %s333
        %s335 = smul.u32 %s24, 8
        %s336 = ssub.s32 %s335, 1
        %p337 = scmp.gt.s32.totalorder %s336, 0
        %s338 = scalar_select %p337, %s336, 0
        %p339 = scmp.lt.s32.totalorder %s23, 1
        %s340 = scalar_select %p339, %s23, 1
        %p341 = scmp.lt.s32.totalorder %s338, 15
        %s342 = scalar_select %p341, %s338, 15
        %s343 = smul.addr %s342, 2
        %s344 = smul.addr %s340, 32
        %s345 = sadd.s32 %s343, %s344
        %s346 = smul.addr %s345, 4
        %s347 = scalar_lea.vmem %s0, %s346
        %s348 = smul.u32 %s24, 8
        %s349 = ssub.s32 %s348, 1
        %p350 = scmp.gt.s32.totalorder %s349, 0
        %s351 = scalar_select %p350, %s349, 0
        %s352 = smul.u32 8, %s24
        %p353 = scmp.lt.s32.totalorder %s23, 1
        %s354 = scalar_select %p353, %s23, 1
        %p355 = scmp.lt.s32.totalorder %s352, 15
        %s356 = scalar_select %p355, %s352, 15
        %s357 = smul.addr %s356, 2
        %s358 = smul.addr %s354, 32
        %s359 = sadd.s32 %s357, %s358
        %s360 = smul.addr %s359, 4
        %s361 = scalar_lea.vmem %s1, %s360
        %s362 = smul.u32 8, %s24
        %s363 = smul.u32 %s24, 8
        %s364 = sadd.s32 %s363, 8
        %p365 = scmp.lt.s32.totalorder %s364, 15
        %s366 = scalar_select %p365, %s364, 15
        %p367 = scmp.lt.s32.totalorder %s23, 1
        %s368 = scalar_select %p367, %s23, 1
        %p369 = scmp.lt.s32.totalorder %s366, 15
        %s370 = scalar_select %p369, %s366, 15
        %s371 = smul.addr %s370, 2
        %s372 = smul.addr %s368, 32
        %s373 = sadd.s32 %s371, %s372
        %s374 = smul.addr %s373, 4
        %s375 = scalar_lea.vmem %s2, %s374
        %s376 = smul.u32 %s24, 8
        %s377 = sadd.s32 %s376, 8
        %p378 = scmp.lt.s32.totalorder %s377, 15
        %s379 = scalar_select %p378, %s377, 15
        %s380 = smul.u32 8, %s24
        %v382 = vld [vmem:[%s347] sm:$0xf]
        %v383 = vld [vmem:[%s347 + $0x4] sm:$0xf]
        %v384 = vld [vmem:[%s375] sm:$0xf]
        %v385 = vld [vmem:[%s375 + $0x4] sm:$0xf]
        %p386 = scmp.eq.s32.totalorder %s24, 0
        %s387 = scalar_select %p386, 1, 0
        %v388 = vstv %s387
        %vm389 = vcmp.eq.s32.totalorder %v388, 1
        %v390 = vsel %vm389, 0, %v382
        %v391 = vsel %vm389, 0, %v383
        %p392 = scmp.eq.s32.totalorder %s24, 1
        %s393 = scalar_select %p392, 1, 0
        %v394 = vstv %s393
        %vm395 = vcmp.eq.s32.totalorder %v394, 1
        %v396 = vsel %vm395, 0, %v384
        %v397 = vsel %vm395, 0, %v385
        %v398 = vld [vmem:[%s361] sm:$0xf]
        %v399 = vld [vmem:[%s361 + $0x4] sm:$0xf]
        %v400 = vld [vmem:[%s361 + $0x8] sm:$0xf]
        %v401 = vld [vmem:[%s361 + $0xc] sm:$0xf]
        %v402 = vld [vmem:[%s361 + $0x10] sm:$0xf]
        %v403 = vld [vmem:[%s361 + $0x14] sm:$0xf]
        %v404 = vld [vmem:[%s361 + $0x18] sm:$0xf]
        %v405 = vld [vmem:[%s361 + $0x1c] sm:$0xf]
        %v406 = vld [vmem:[%s361 + $0x20] sm:$0xf]
        %v407 = vld [vmem:[%s361 + $0x24] sm:$0xf]
        %v408 = vld [vmem:[%s361 + $0x28] sm:$0xf]
        %v409 = vld [vmem:[%s361 + $0x2c] sm:$0xf]
        %v410 = vld [vmem:[%s361 + $0x30] sm:$0xf]
        %v411 = vld [vmem:[%s361 + $0x34] sm:$0xf]
        %v412 = vld [vmem:[%s361 + $0x38] sm:$0xf]
        %v413 = vld [vmem:[%s361 + $0x3c] sm:$0xf]
        %v434 = vunpack.c.l.b16 %v390
        %v435 = vunpack.c.l.b16 %v391
        %v436 = vunpack.c.l.b16 %v398
        %v437 = vunpack.c.l.b16 %v399
        %v438 = vunpack.c.l.b16 %v400
        %v439 = vunpack.c.l.b16 %v401
        %v440 = vunpack.c.l.b16 %v402
        %v441 = vunpack.c.l.b16 %v403
        %v442 = vunpack.c.l.b16 %v404
        %v443 = vunpack.c.l.b16 %v405
        %v444 = vunpack.c.l.b16 %v406
        %v445 = vunpack.c.l.b16 %v407
        %v446 = vunpack.c.l.b16 %v408
        %v447 = vunpack.c.l.b16 %v409
        %v448 = vunpack.c.l.b16 %v410
        %v449 = vunpack.c.l.b16 %v411
        %v450 = vunpack.c.l.b16 %v412
        %v451 = vunpack.c.l.b16 %v413
        %v452 = vunpack.c.l.b16 %v396
        %v453 = vunpack.c.l.b16 %v397
        %v454 = vpack.c.b16 %v435, %v434
        %v455 = vpack.c.b16 %v437, %v436
        %v456 = vpack.c.b16 %v439, %v438
        %v457 = vpack.c.b16 %v441, %v440
        %v458 = vpack.c.b16 %v443, %v442
        %v459 = vpack.c.b16 %v445, %v444
        %v460 = vpack.c.b16 %v447, %v446
        %v461 = vpack.c.b16 %v449, %v448
        %v462 = vpack.c.b16 %v451, %v450
        %v463 = vpack.c.b16 %v453, %v452
        %v465 = vshrl.u32 %v454, 16
        %v467 = vrot.slane %v465, 7
        %v468 = vshll.u32 %v454, 16
        %v470 = vor.u32 %v467, %v468
        %v472 = vshrl.u32 %v455, 16
        %v474 = vrot.slane %v472, 7
        %v475 = vshll.u32 %v455, 16
        %v477 = vor.u32 %v474, %v475
        %v479 = vshrl.u32 %v456, 16
        %v481 = vrot.slane %v479, 7
        %v482 = vshll.u32 %v456, 16
        %v484 = vor.u32 %v481, %v482
        %v486 = vshrl.u32 %v457, 16
        %v488 = vrot.slane %v486, 7
        %v489 = vshll.u32 %v457, 16
        %v491 = vor.u32 %v488, %v489
        %v493 = vshrl.u32 %v458, 16
        %v495 = vrot.slane %v493, 7
        %v496 = vshll.u32 %v458, 16
        %v498 = vor.u32 %v495, %v496
        %v500 = vshrl.u32 %v459, 16
        %v502 = vrot.slane %v500, 7
        %v503 = vshll.u32 %v459, 16
        %v505 = vor.u32 %v502, %v503
        %v507 = vshrl.u32 %v460, 16
        %v509 = vrot.slane %v507, 7
        %v510 = vshll.u32 %v460, 16
        %v512 = vor.u32 %v509, %v510
        %v514 = vshrl.u32 %v461, 16
        %v516 = vrot.slane %v514, 7
        %v517 = vshll.u32 %v461, 16
        %v519 = vor.u32 %v516, %v517
        %v521 = vshrl.u32 %v462, 16
        %v523 = vrot.slane %v521, 7
        %v524 = vshll.u32 %v462, 16
        %v526 = vor.u32 %v523, %v524
        %v528 = vshrl.u32 %v463, 16
        %v530 = vrot.slane %v528, 7
        %v531 = vshll.u32 %v463, 16
        %v533 = vor.u32 %v530, %v531
        %vm554 = vcmask 1040384
        %vm555 = vsmask.f32 256
        %vm556 = vmand %vm554, %vm555
        %v557 = vsel %vm556, 0, %v470
        %v558 = vsel %vm556, 0, %v477
        %v559 = vsel %vm556, 0, %v484
        %v560 = vsel %vm556, 0, %v491
        %v561 = vsel %vm556, 0, %v498
        %v562 = vsel %vm556, 0, %v505
        %v563 = vsel %vm556, 0, %v512
        %v564 = vsel %vm556, 0, %v519
        %v565 = vsel %vm556, 0, %v526
        %v566 = vsel %vm556, 0, %v533
        %v567 = vsel %vm556, %v467, 0
        %v568 = vsel %vm556, %v474, 0
        %v569 = vsel %vm556, %v481, 0
        %v570 = vsel %vm556, %v488, 0
        %v571 = vsel %vm556, %v495, 0
        %v572 = vsel %vm556, %v502, 0
        %v573 = vsel %vm556, %v509, 0
        %v574 = vsel %vm556, %v516, 0
        %v575 = vsel %vm556, %v523, 0
        %v576 = vsel %vm556, %v530, 0
        %vm577 = vsmask.f32 7424
        %v579 = vshrl.u32 %v557, 16
        %v581 = vshll.u32 %v557, 16
        %v583 = vrot.slane %v581, 1
        %v584 = vor.u32 %v579, %v583
        %v586 = vshll.u32 %v567, 16
        %v588 = vrot.slane %v586, 1
        %v589 = vsel %vm577, %v584, %v588
        %v591 = vshrl.u32 %v558, 16
        %v593 = vshll.u32 %v558, 16
        %v595 = vrot.slane %v593, 1
        %v596 = vor.u32 %v591, %v595
        %v598 = vshll.u32 %v568, 16
        %v600 = vrot.slane %v598, 1
        %v601 = vsel %vm577, %v596, %v600
        %v603 = vshrl.u32 %v559, 16
        %v605 = vshll.u32 %v559, 16
        %v607 = vrot.slane %v605, 1
        %v608 = vor.u32 %v603, %v607
        %v610 = vshll.u32 %v569, 16
        %v612 = vrot.slane %v610, 1
        %v613 = vsel %vm577, %v608, %v612
        %v615 = vshrl.u32 %v560, 16
        %v617 = vshll.u32 %v560, 16
        %v619 = vrot.slane %v617, 1
        %v620 = vor.u32 %v615, %v619
        %v622 = vshll.u32 %v570, 16
        %v624 = vrot.slane %v622, 1
        %v625 = vsel %vm577, %v620, %v624
        %v627 = vshrl.u32 %v561, 16
        %v629 = vshll.u32 %v561, 16
        %v631 = vrot.slane %v629, 1
        %v632 = vor.u32 %v627, %v631
        %v634 = vshll.u32 %v571, 16
        %v636 = vrot.slane %v634, 1
        %v637 = vsel %vm577, %v632, %v636
        %v639 = vshrl.u32 %v562, 16
        %v641 = vshll.u32 %v562, 16
        %v643 = vrot.slane %v641, 1
        %v644 = vor.u32 %v639, %v643
        %v646 = vshll.u32 %v572, 16
        %v648 = vrot.slane %v646, 1
        %v649 = vsel %vm577, %v644, %v648
        %v651 = vshrl.u32 %v563, 16
        %v653 = vshll.u32 %v563, 16
        %v655 = vrot.slane %v653, 1
        %v656 = vor.u32 %v651, %v655
        %v658 = vshll.u32 %v573, 16
        %v660 = vrot.slane %v658, 1
        %v661 = vsel %vm577, %v656, %v660
        %v663 = vshrl.u32 %v564, 16
        %v665 = vshll.u32 %v564, 16
        %v667 = vrot.slane %v665, 1
        %v668 = vor.u32 %v663, %v667
        %v670 = vshll.u32 %v574, 16
        %v672 = vrot.slane %v670, 1
        %v673 = vsel %vm577, %v668, %v672
        %vm690 = vcmask 1046528
        %v691 = vrot.slane %v557, 1
        %v692 = vrot.slane %v567, 1
        %v693 = vsel %vm690, %v691, %v692
        %v694 = vrot.slane %v558, 1
        %v695 = vrot.slane %v568, 1
        %v696 = vsel %vm690, %v694, %v695
        %v697 = vrot.slane %v559, 1
        %v698 = vrot.slane %v569, 1
        %v699 = vsel %vm690, %v697, %v698
        %v700 = vrot.slane %v560, 1
        %v701 = vrot.slane %v570, 1
        %v702 = vsel %vm690, %v700, %v701
        %v703 = vrot.slane %v561, 1
        %v704 = vrot.slane %v571, 1
        %v705 = vsel %vm690, %v703, %v704
        %v706 = vrot.slane %v562, 1
        %v707 = vrot.slane %v572, 1
        %v708 = vsel %vm690, %v706, %v707
        %v709 = vrot.slane %v563, 1
        %v710 = vrot.slane %v573, 1
        %v711 = vsel %vm690, %v709, %v710
        %v712 = vrot.slane %v564, 1
        %v713 = vrot.slane %v574, 1
        %v714 = vsel %vm690, %v712, %v713
        %v716 = vshrl.u32 %v565, 16
        %v718 = vshll.u32 %v565, 16
        %v720 = vrot.slane %v718, 1
        %v721 = vor.u32 %v716, %v720
        %v723 = vshll.u32 %v575, 16
        %v725 = vrot.slane %v723, 1
        %v726 = vsel %vm577, %v721, %v725
        %v729 = vrot.slane %v565, 1
        %v730 = vrot.slane %v575, 1
        %v731 = vsel %vm690, %v729, %v730
        %v733 = vshrl.u32 %v566, 16
        %v735 = vshll.u32 %v566, 16
        %v737 = vrot.slane %v735, 1
        %v738 = vor.u32 %v733, %v737
        %v740 = vshll.u32 %v576, 16
        %v742 = vrot.slane %v740, 1
        %v743 = vsel %vm577, %v738, %v742
        %v746 = vrot.slane %v566, 1
        %v747 = vrot.slane %v576, 1
        %v748 = vsel %vm690, %v746, %v747
        %749 = vrot.lane.b32.xlu0 %v589, 3
        %v750 = vpop.permute.xlu0 %749
        %751 = vrot.lane.b32.xlu0 %v601, 3
        %v752 = vpop.permute.xlu0 %751
        %753 = vrot.lane.b32.xlu0 %v613, 3
        %v754 = vpop.permute.xlu0 %753
        %755 = vrot.lane.b32.xlu0 %v625, 3
        %v756 = vpop.permute.xlu0 %755
        %757 = vrot.lane.b32.xlu0 %v637, 3
        %v758 = vpop.permute.xlu0 %757
        %759 = vrot.lane.b32.xlu0 %v649, 3
        %v760 = vpop.permute.xlu0 %759
        %761 = vrot.lane.b32.xlu0 %v661, 3
        %v762 = vpop.permute.xlu0 %761
        %763 = vrot.lane.b32.xlu0 %v673, 3
        %v764 = vpop.permute.xlu0 %763
        %765 = vrot.lane.b32.xlu0 %v693, 6
        %v766 = vpop.permute.xlu0 %765
        %767 = vrot.lane.b32.xlu0 %v696, 6
        %v768 = vpop.permute.xlu0 %767
        %769 = vrot.lane.b32.xlu0 %v699, 6
        %v770 = vpop.permute.xlu0 %769
        %771 = vrot.lane.b32.xlu0 %v702, 6
        %v772 = vpop.permute.xlu0 %771
        %773 = vrot.lane.b32.xlu0 %v705, 6
        %v774 = vpop.permute.xlu0 %773
        %775 = vrot.lane.b32.xlu0 %v708, 6
        %v776 = vpop.permute.xlu0 %775
        %777 = vrot.lane.b32.xlu0 %v711, 6
        %v778 = vpop.permute.xlu0 %777
        %779 = vrot.lane.b32.xlu0 %v714, 6
        %v780 = vpop.permute.xlu0 %779
        %781 = vrot.lane.b32.xlu0 %v558, 9
        %v782 = vpop.permute.xlu0 %781
        %783 = vrot.lane.b32.xlu0 %v559, 9
        %v784 = vpop.permute.xlu0 %783
        %785 = vrot.lane.b32.xlu0 %v560, 9
        %v786 = vpop.permute.xlu0 %785
        %787 = vrot.lane.b32.xlu0 %v561, 9
        %v788 = vpop.permute.xlu0 %787
        %789 = vrot.lane.b32.xlu0 %v562, 9
        %v790 = vpop.permute.xlu0 %789
        %791 = vrot.lane.b32.xlu0 %v563, 9
        %v792 = vpop.permute.xlu0 %791
        %793 = vrot.lane.b32.xlu0 %v564, 9
        %v794 = vpop.permute.xlu0 %793
        %795 = vrot.lane.b32.xlu0 %v565, 9
        %v796 = vpop.permute.xlu0 %795
        %797 = vrot.lane.b32.xlu0 %v601, 12
        %v798 = vpop.permute.xlu0 %797
        %799 = vrot.lane.b32.xlu0 %v613, 12
        %v800 = vpop.permute.xlu0 %799
        %801 = vrot.lane.b32.xlu0 %v625, 12
        %v802 = vpop.permute.xlu0 %801
        %803 = vrot.lane.b32.xlu0 %v637, 12
        %v804 = vpop.permute.xlu0 %803
        %805 = vrot.lane.b32.xlu0 %v649, 12
        %v806 = vpop.permute.xlu0 %805
        %807 = vrot.lane.b32.xlu0 %v661, 12
        %v808 = vpop.permute.xlu0 %807
        %809 = vrot.lane.b32.xlu0 %v673, 12
        %v810 = vpop.permute.xlu0 %809
        %811 = vrot.lane.b32.xlu0 %v726, 12
        %v812 = vpop.permute.xlu0 %811
        %813 = vrot.lane.b32.xlu0 %v696, 15
        %v814 = vpop.permute.xlu0 %813
        %815 = vrot.lane.b32.xlu0 %v699, 15
        %v816 = vpop.permute.xlu0 %815
        %817 = vrot.lane.b32.xlu0 %v702, 15
        %v818 = vpop.permute.xlu0 %817
        %819 = vrot.lane.b32.xlu0 %v705, 15
        %v820 = vpop.permute.xlu0 %819
        %821 = vrot.lane.b32.xlu0 %v708, 15
        %v822 = vpop.permute.xlu0 %821
        %823 = vrot.lane.b32.xlu0 %v711, 15
        %v824 = vpop.permute.xlu0 %823
        %825 = vrot.lane.b32.xlu0 %v714, 15
        %v826 = vpop.permute.xlu0 %825
        %827 = vrot.lane.b32.xlu0 %v731, 15
        %v828 = vpop.permute.xlu0 %827
        %829 = vrot.lane.b32.xlu0 %v559, 18
        %v830 = vpop.permute.xlu0 %829
        %831 = vrot.lane.b32.xlu0 %v560, 18
        %v832 = vpop.permute.xlu0 %831
        %833 = vrot.lane.b32.xlu0 %v561, 18
        %v834 = vpop.permute.xlu0 %833
        %835 = vrot.lane.b32.xlu0 %v562, 18
        %v836 = vpop.permute.xlu0 %835
        %837 = vrot.lane.b32.xlu0 %v563, 18
        %v838 = vpop.permute.xlu0 %837
        %839 = vrot.lane.b32.xlu0 %v564, 18
        %v840 = vpop.permute.xlu0 %839
        %841 = vrot.lane.b32.xlu0 %v565, 18
        %v842 = vpop.permute.xlu0 %841
        %843 = vrot.lane.b32.xlu0 %v566, 18
        %v844 = vpop.permute.xlu0 %843
        %845 = vrot.lane.b32.xlu0 %v613, 21
        %v846 = vpop.permute.xlu0 %845
        %847 = vrot.lane.b32.xlu0 %v625, 21
        %v848 = vpop.permute.xlu0 %847
        %849 = vrot.lane.b32.xlu0 %v637, 21
        %v850 = vpop.permute.xlu0 %849
        %851 = vrot.lane.b32.xlu0 %v649, 21
        %v852 = vpop.permute.xlu0 %851
        %853 = vrot.lane.b32.xlu0 %v661, 21
        %v854 = vpop.permute.xlu0 %853
        %855 = vrot.lane.b32.xlu0 %v673, 21
        %v856 = vpop.permute.xlu0 %855
        %857 = vrot.lane.b32.xlu0 %v726, 21
        %v858 = vpop.permute.xlu0 %857
        %859 = vrot.lane.b32.xlu0 %v743, 21
        %v860 = vpop.permute.xlu0 %859
        %861 = vrot.lane.b32.xlu0 %v699, 24
        %v862 = vpop.permute.xlu0 %861
        %863 = vrot.lane.b32.xlu0 %v702, 24
        %v864 = vpop.permute.xlu0 %863
        %865 = vrot.lane.b32.xlu0 %v705, 24
        %v866 = vpop.permute.xlu0 %865
        %867 = vrot.lane.b32.xlu0 %v708, 24
        %v868 = vpop.permute.xlu0 %867
        %869 = vrot.lane.b32.xlu0 %v711, 24
        %v870 = vpop.permute.xlu0 %869
        %871 = vrot.lane.b32.xlu0 %v714, 24
        %v872 = vpop.permute.xlu0 %871
        %873 = vrot.lane.b32.xlu0 %v731, 24
        %v874 = vpop.permute.xlu0 %873
        %875 = vrot.lane.b32.xlu0 %v748, 24
        %v876 = vpop.permute.xlu0 %875
        %vm877 = vcmask 23552
        %v879 = vsel %vm877, %v557, %v750
        %v881 = vsel %vm877, %v558, %v752
        %v883 = vsel %vm877, %v559, %v754
        %v885 = vsel %vm877, %v560, %v756
        %v887 = vsel %vm877, %v561, %v758
        %v889 = vsel %vm877, %v562, %v760
        %v891 = vsel %vm877, %v563, %v762
        %v893 = vsel %vm877, %v564, %v764
        %vm894 = vcmask 48128
        %v896 = vsel %vm894, %v879, %v766
        %v898 = vsel %vm894, %v881, %v768
        %v900 = vsel %vm894, %v883, %v770
        %v902 = vsel %vm894, %v885, %v772
        %v904 = vsel %vm894, %v887, %v774
        %v906 = vsel %vm894, %v889, %v776
        %v908 = vsel %vm894, %v891, %v778
        %v910 = vsel %vm894, %v893, %v780
        %vm911 = vcmask 72704
        %v913 = vsel %vm911, %v896, %v782
        %v915 = vsel %vm911, %v898, %v784
        %v917 = vsel %vm911, %v900, %v786
        %v919 = vsel %vm911, %v902, %v788
        %v921 = vsel %vm911, %v904, %v790
        %v923 = vsel %vm911, %v906, %v792
        %v925 = vsel %vm911, %v908, %v794
        %v927 = vsel %vm911, %v910, %v796
        %vm928 = vcmask 97280
        %v930 = vsel %vm928, %v913, %v798
        %v932 = vsel %vm928, %v915, %v800
        %v934 = vsel %vm928, %v917, %v802
        %v936 = vsel %vm928, %v919, %v804
        %v938 = vsel %vm928, %v921, %v806
        %v940 = vsel %vm928, %v923, %v808
        %v942 = vsel %vm928, %v925, %v810
        %v944 = vsel %vm928, %v927, %v812
        %vm945 = vcmask 121856
        %v947 = vsel %vm945, %v930, %v814
        %v949 = vsel %vm945, %v932, %v816
        %v951 = vsel %vm945, %v934, %v818
        %v953 = vsel %vm945, %v936, %v820
        %v955 = vsel %vm945, %v938, %v822
        %v957 = vsel %vm945, %v940, %v824
        %v959 = vsel %vm945, %v942, %v826
        %v961 = vsel %vm945, %v944, %v828
        %vm962 = vcmask 146432
        %v964 = vsel %vm962, %v947, %v830
        %v966 = vsel %vm962, %v949, %v832
        %v968 = vsel %vm962, %v951, %v834
        %v970 = vsel %vm962, %v953, %v836
        %v972 = vsel %vm962, %v955, %v838
        %v974 = vsel %vm962, %v957, %v840
        %v976 = vsel %vm962, %v959, %v842
        %v978 = vsel %vm962, %v961, %v844
        %vm979 = vcmask 171008
        %v981 = vsel %vm979, %v964, %v846
        %v983 = vsel %vm979, %v966, %v848
        %v985 = vsel %vm979, %v968, %v850
        %v987 = vsel %vm979, %v970, %v852
        %v989 = vsel %vm979, %v972, %v854
        %v991 = vsel %vm979, %v974, %v856
        %v993 = vsel %vm979, %v976, %v858
        %v995 = vsel %vm979, %v978, %v860
        %vm996 = vcmask 195584
        %v998 = vsel %vm996, %v981, %v862
        %v1000 = vsel %vm996, %v983, %v864
        %v1002 = vsel %vm996, %v985, %v866
        %v1004 = vsel %vm996, %v987, %v868
        %v1006 = vsel %vm996, %v989, %v870
        %v1008 = vsel %vm996, %v991, %v872
        %v1010 = vsel %vm996, %v993, %v874
        %v1012 = vsel %vm996, %v995, %v876
        %v1013 = vld [vmem:[%s3] sm:$0xf]
        %v1014 = vld [vmem:[%s3 + $0x4] sm:$0xf]
        %v1015 = vld [vmem:[%s3 + $0x8] sm:$0xf]
        %v1016 = vld [vmem:[%s3 + $0xc] sm:$0x3]
        %v1017 = vld [vmem:[%s4] sm:$0x1]
        %v1019 = vlaneseq
        %v1020 = vshrl.u32 %v1019, 7
        %v1021 = vsub.s32 0, %v1020
        %v1022 = vrot.slane %v1017, %v1021
        %v1028 = vunpack.c.l.b16 %v1013
        %v1029 = vunpack.c.l.b16 %v1014
        %v1030 = vunpack.c.l.b16 %v1015
        %v1031 = vunpack.c.l.b16 %v1016
        %v1032 = vpack.c.b16 %v1029, %v1028
        %v1033 = vpack.c.b16 %v1031, %v1030
        %vm1035 = vcmask 220160
        %v1036 = vsel %vm1035, %v998, 0
        %v1038 = vsel %vm1035, %v1000, 0
        %v1040 = vsel %vm1035, %v1002, 0
        %v1042 = vsel %vm1035, %v1004, 0
        %v1044 = vsel %vm1035, %v1006, 0
        %v1046 = vsel %vm1035, %v1008, 0
        %v1048 = vsel %vm1035, %v1010, 0
        %v1050 = vsel %vm1035, %v1012, 0
        %vm1052 = vcmask 1044480
        %vm1053 = vcmask 1045504
        %v1054 = vsel %vm1052, 4294967295, 65535
        %v1055 = vsel %vm1053, %v1054, 0
        %v1057 = vand.u32 %v1033, %v1055
        %1059 = vmatprep.subr.bf16.mxu0 0
        %1060 = vmatpush1.bf16.msra.mxu0 0
        %1061 = vmatprep.subr.bf16.mxu0 0
        %1062 = vmatpush1.bf16.msra.mxu0 0
        %1063 = vmatprep.subr.bf16.mxu0 0
        %1064 = vmatpush1.bf16.msra.mxu0 0
        %1065 = vmatprep.subr.bf16.mxu0 0
        %1066 = vmatpush1.bf16.msra.mxu0 0
        %1067 = vmatprep.subr.bf16.mxu0 0
        %1068 = vmatpush1.bf16.msra.mxu0 0
        %1069 = vmatprep.subr.bf16.mxu0 0
        %1070 = vmatpush1.bf16.msra.mxu0 0
        %1071 = vmatprep.subr.bf16.mxu0 0
        %1072 = vmatpush1.bf16.msra.mxu0 %v1057
        %1073 = vmatprep.subr.bf16.mxu0 0
        %1074 = vmatpush1.bf16.msra.mxu0 %v1032
        %1075 = vmatprep.subr.bf16.mxu0 0
        %1076 = vmatpush2.bf16.msra.mxu0 0
        %1077 = vmatprep.subr.bf16.mxu0 0
        %1078 = vmatpush2.bf16.msra.mxu0 0
        %1079 = vmatprep.subr.bf16.mxu0 0
        %1080 = vmatpush2.bf16.msra.mxu0 0
        %1081 = vmatprep.subr.bf16.mxu0 0
        %1082 = vmatpush2.bf16.msra.mxu0 0
        %1083 = vmatprep.subr.bf16.mxu0 0
        %1084 = vmatpush2.bf16.msra.mxu0 0
        %1085 = vmatprep.subr.bf16.mxu0 0
        %1086 = vmatpush2.bf16.msra.mxu0 0
        %1087 = vmatprep.subr.bf16.mxu0 0
        %1088 = vmatpush2.bf16.msra.mxu0 0
        %1089 = vmatprep.subr.bf16.mxu0 0
        %1090 = vmatpush2.bf16.msra.mxu0 0
        %1091 = vmatprep.mubr.bf16.mxu0 0
        %1092 = vmatmul.mubr.bf16.gmra.mxu0 %v1036
        %v1093 = vpop.f32.mrf.mxu0
        %v1094 = vadd.f32 %v1022, %v1093
        %v1095 = vpop.f32.mrf.mxu0
        %v1096 = vpop.f32.mrf.mxu0
        %v1097 = vadd.f32 %v1022, %v1096
        %v1098 = vpop.f32.mrf.mxu0
        %1099 = vmatprep.mubr.bf16.mxu0 0
        %1100 = vmatmul.mubr.bf16.gmra.mxu0 %v1038
        %v1101 = vpop.f32.mrf.mxu0
        %v1102 = vadd.f32 %v1022, %v1101
        %v1103 = vpop.f32.mrf.mxu0
        %v1104 = vpop.f32.mrf.mxu0
        %v1105 = vadd.f32 %v1022, %v1104
        %v1106 = vpop.f32.mrf.mxu0
        %1107 = vmatprep.mubr.bf16.mxu0 0
        %1108 = vmatmul.mubr.bf16.gmra.mxu0 %v1040
        %v1109 = vpop.f32.mrf.mxu0
        %v1110 = vadd.f32 %v1022, %v1109
        %v1111 = vpop.f32.mrf.mxu0
        %v1112 = vpop.f32.mrf.mxu0
        %v1113 = vadd.f32 %v1022, %v1112
        %v1114 = vpop.f32.mrf.mxu0
        %1115 = vmatprep.mubr.bf16.mxu0 0
        %1116 = vmatmul.mubr.bf16.gmra.mxu0 %v1042
        %v1117 = vpop.f32.mrf.mxu0
        %v1118 = vadd.f32 %v1022, %v1117
        %v1119 = vpop.f32.mrf.mxu0
        %v1120 = vpop.f32.mrf.mxu0
        %v1121 = vadd.f32 %v1022, %v1120
        %v1122 = vpop.f32.mrf.mxu0
        %1123 = vmatprep.mubr.bf16.mxu0 0
        %1124 = vmatmul.mubr.bf16.gmra.mxu0 %v1044
        %v1125 = vpop.f32.mrf.mxu0
        %v1126 = vadd.f32 %v1022, %v1125
        %v1127 = vpop.f32.mrf.mxu0
        %v1128 = vpop.f32.mrf.mxu0
        %v1129 = vadd.f32 %v1022, %v1128
        %v1130 = vpop.f32.mrf.mxu0
        %1131 = vmatprep.mubr.bf16.mxu0 0
        %1132 = vmatmul.mubr.bf16.gmra.mxu0 %v1046
        %v1133 = vpop.f32.mrf.mxu0
        %v1134 = vadd.f32 %v1022, %v1133
        %v1135 = vpop.f32.mrf.mxu0
        %v1136 = vpop.f32.mrf.mxu0
        %v1137 = vadd.f32 %v1022, %v1136
        %v1138 = vpop.f32.mrf.mxu0
        %1139 = vmatprep.mubr.bf16.mxu0 0
        %1140 = vmatmul.mubr.bf16.gmra.mxu0 %v1048
        %v1141 = vpop.f32.mrf.mxu0
        %v1142 = vadd.f32 %v1022, %v1141
        %v1143 = vpop.f32.mrf.mxu0
        %v1144 = vpop.f32.mrf.mxu0
        %v1145 = vadd.f32 %v1022, %v1144
        %v1146 = vpop.f32.mrf.mxu0
        %1147 = vmatprep.mubr.bf16.mxu0 0
        %1148 = vmatmul.mubr.bf16.gmra.mxu0 %v1050
        %v1149 = vpop.f32.mrf.mxu0
        %v1150 = vadd.f32 %v1022, %v1149
        %v1151 = vpop.f32.mrf.mxu0
        %v1152 = vpop.f32.mrf.mxu0
        %v1153 = vadd.f32 %v1022, %v1152
        %v1154 = vpop.f32.mrf.mxu0
        %1155 = vdwg.mxu0
        %v1156 = vmax.f32 %v1094, 0.0
        %v1157 = vmax.f32 %v1097, 0.0
        %v1158 = vmax.f32 %v1102, 0.0
        %v1159 = vmax.f32 %v1105, 0.0
        %v1160 = vmax.f32 %v1110, 0.0
        %v1161 = vmax.f32 %v1113, 0.0
        %v1162 = vmax.f32 %v1118, 0.0
        %v1163 = vmax.f32 %v1121, 0.0
        %v1164 = vmax.f32 %v1126, 0.0
        %v1165 = vmax.f32 %v1129, 0.0
        %v1166 = vmax.f32 %v1134, 0.0
        %v1167 = vmax.f32 %v1137, 0.0
        %v1168 = vmax.f32 %v1142, 0.0
        %v1169 = vmax.f32 %v1145, 0.0
        %v1170 = vmax.f32 %v1150, 0.0
        %v1171 = vmax.f32 %v1153, 0.0
        %v1172 = vpack.c.bf16 %v1157, %v1156
        %v1173 = vpack.c.bf16 %v1159, %v1158
        %v1174 = vpack.c.bf16 %v1161, %v1160
        %v1175 = vpack.c.bf16 %v1163, %v1162
        %v1176 = vpack.c.bf16 %v1165, %v1164
        %v1177 = vpack.c.bf16 %v1167, %v1166
        %v1178 = vpack.c.bf16 %v1169, %v1168
        %v1179 = vpack.c.bf16 %v1171, %v1170
        %v1188 = vunpack.c.l.b16 %v1172
        %v1189 = vunpack.c.h.b16 %v1172
        %v1190 = vunpack.c.l.b16 %v1173
        %v1191 = vunpack.c.h.b16 %v1173
        %v1192 = vunpack.c.l.b16 %v1174
        %v1193 = vunpack.c.h.b16 %v1174
        %v1194 = vunpack.c.l.b16 %v1175
        %v1195 = vunpack.c.h.b16 %v1175
        %v1196 = vunpack.c.l.b16 %v1176
        %v1197 = vunpack.c.h.b16 %v1176
        %v1198 = vunpack.c.l.b16 %v1177
        %v1199 = vunpack.c.h.b16 %v1177
        %v1200 = vunpack.c.l.b16 %v1178
        %v1201 = vunpack.c.h.b16 %v1178
        %v1202 = vunpack.c.l.b16 %v1179
        %v1203 = vunpack.c.h.b16 %v1179
        %v1204 = vpack.c.b16 %v1188, %v1188
        %v1205 = vpack.c.b16 %v1189, %v1189
        %v1206 = vpack.c.b16 %v1190, %v1190
        %v1207 = vpack.c.b16 %v1191, %v1191
        %v1208 = vpack.c.b16 %v1192, %v1192
        %v1209 = vpack.c.b16 %v1193, %v1193
        %v1210 = vpack.c.b16 %v1194, %v1194
        %v1211 = vpack.c.b16 %v1195, %v1195
        %v1212 = vpack.c.b16 %v1196, %v1196
        %v1213 = vpack.c.b16 %v1197, %v1197
        %v1214 = vpack.c.b16 %v1198, %v1198
        %v1215 = vpack.c.b16 %v1199, %v1199
        %v1216 = vpack.c.b16 %v1200, %v1200
        %v1217 = vpack.c.b16 %v1201, %v1201
        %v1218 = vpack.c.b16 %v1202, %v1202
        %v1219 = vpack.c.b16 %v1203, %v1203
        %vm1236 = vcmask 519168
        %1237 = vst.msk [vmem:[%s334] sm:$0xf] %vm1236, %v1204
        %1238 = vst.msk [vmem:[%s334 + $0x4] sm:$0xf] %vm1236, %v1205
        %1239 = vst.msk [vmem:[%s334 + $0x8] sm:$0xf] %vm1236, %v1206
        %1240 = vst.msk [vmem:[%s334 + $0xc] sm:$0xf] %vm1236, %v1207
        %1241 = vst.msk [vmem:[%s334 + $0x10] sm:$0xf] %vm1236, %v1208
        %1242 = vst.msk [vmem:[%s334 + $0x14] sm:$0xf] %vm1236, %v1209
        %1243 = vst.msk [vmem:[%s334 + $0x18] sm:$0xf] %vm1236, %v1210
        %1244 = vst.msk [vmem:[%s334 + $0x1c] sm:$0xf] %vm1236, %v1211
        %1245 = vst.msk [vmem:[%s334 + $0x20] sm:$0xf] %vm1236, %v1212
        %1246 = vst.msk [vmem:[%s334 + $0x24] sm:$0xf] %vm1236, %v1213
        %1247 = vst.msk [vmem:[%s334 + $0x28] sm:$0xf] %vm1236, %v1214
        %1248 = vst.msk [vmem:[%s334 + $0x2c] sm:$0xf] %vm1236, %v1215
        %1249 = vst.msk [vmem:[%s334 + $0x30] sm:$0xf] %vm1236, %v1216
        %1250 = vst.msk [vmem:[%s334 + $0x34] sm:$0xf] %vm1236, %v1217
        %1251 = vst.msk [vmem:[%s334 + $0x38] sm:$0xf] %vm1236, %v1218
        %1252 = vst.msk [vmem:[%s334 + $0x3c] sm:$0xf] %vm1236, %v1219
        %s1253 = sand.u32 %s183, 1
        %s1254 = scalar_lea.sflag [#allocation3], %s1253
        %s1255 = sand.u32 %s183, 1
        %s1256 = smul.addr %s1255, 64
        %s1257 = scalar_lea.vmem [#allocation2], %s1256
        // Predicated region
        $region41: #{tpu_custom_call.1} parent=39 // pred_check
          %p1258 = pneg %p193
        $region42: #{tpu_custom_call.1} parent=39 // pred_check_branch
          %1260 = sbr.rel (%p1258) target = $region44
        $region43: #{tpu_custom_call.1} parent=39 // pred_region
          %s1261 = smul.u32 8, %s24
          %s1263 = ssub.s32 1024, 1024
          %1264 = vsyncadd %s1254, %s1263
          %s1265 = smul.addr %s1261, 2
          %s1266 = smul.addr %s23, 32
          %s1267 = sadd.s32 %s1265, %s1266
          %s1268 = smul.addr %s1267, 64
          %s1269 = scalar_lea.hbm %s5, %s1268
          %s1270 = sshll.u32 %s1257, 4
          %s1271 = int_to_ptr.vmem [resolvable:$true] %s1270
          %1276 = dma.vmem_to_hbm [thread:$0]  %s1271, 1024, %s1269, %s1254, 64, 64, 4
        $region44: #{tpu_custom_call.1} parent=39 // pred_fallthru
          _
      $region40: #{tpu_custom_call.1} parent=5 // pred_fallthru
        _
      %p1277 = scmp.le.s32.totalorder 2, %s14
      // Predicated region
      $region45: #{tpu_custom_call.1} parent=5 // pred_check
        %p1278 = pneg %p1277
      $region46: #{tpu_custom_call.1} parent=5 // pred_check_branch
        %1280 = sbr.rel (%p1278) target = $region48
      $region47: #{tpu_custom_call.1} parent=5 // pred_region
        %s1281 = ssub.s32 %s14, 2
        // Predicated region
        $region49: #{tpu_custom_call.1} parent=47 // pred_check
          %p1282 = pneg %p199
        $region50: #{tpu_custom_call.1} parent=47 // pred_check_branch
          %1284 = sbr.rel (%p1282) target = $region52
        $region51: #{tpu_custom_call.1} parent=47 // pred_region
          %s1285 = sand.u32 %s184, 1
          %s1286 = scalar_lea.sflag [#allocation3], %s1285
          %s1287 = sand.u32 %s184, 1
          %s1288 = smul.addr %s1287, 64
          %s1289 = scalar_lea.vmem [#allocation2], %s1288
          %1290 = dma.done %s1286, 1024
        $region52: #{tpu_custom_call.1} parent=47 // pred_fallthru
          _
      $region48: #{tpu_custom_call.1} parent=5 // pred_fallthru
        _
    $region6: #{tpu_custom_call.1} parent=1 // loop_footer
      %s18 = sadd.s32 1, %s14
    $region7: #{tpu_custom_call.1} parent=1 // loop_footer_branch
      %13 = sbr.rel target = $region3
    $region8: #{tpu_custom_call.1} parent=1 // loop_exit
      _
    %1291 = vsyncpa [#allocation3], 1
    %s1292 = scalar_lea.sflag [#allocation3], 1
    %1293 = vsyncpa %s1292, 1

</llo_original>
